<compile_context>
chip_gen: v7x
topology: tpu7x:2x2x1
jax: 0.10.0
libtpu: 0.0.40
codegen_flags: <defaults>
</compile_context>

<pallas_src>
import math

import jax
import jax.numpy as jnp
from jax.experimental import pallas as pl
from jax.experimental.pallas import tpu as pltpu


def _opt_encoder_kernel(f_ref, o_ref):
    # Forward pass: return the parameter unchanged (single vreg-sized copy).
    o_ref[...] = f_ref[...]


def opt_encoder_forward_fast(x, f):
    """Recommended implementation: forward(x) == f, so just return f.

    The whole module is a parameter pass-through; any kernel launch is pure
    overhead. Downstream consumers should fuse/broadcast `f` themselves
    rather than materializing copies here.
    """
    del x  # forward(x) ignores its input
    return f


def opt_encoder_forward(x, f):
    """Pallas implementation of OptEncoder.forward (kept for kernel parity).

    Grid-less pallas_call: whole-array VMEM specs for the (1, bottleneck_size)
    parameter, output aliased to the input.

    Args:
      x: any input array (ignored, exactly as in the PyTorch module).
      f: parameter of shape (1, bottleneck_size).

    Returns:
      Array of shape (1, bottleneck_size) equal to `f`.
    """
    del x  # forward(x) ignores its input; never enters the kernel / DMA.
    return pl.pallas_call(
        _opt_encoder_kernel,
        out_shape=jax.ShapeDtypeStruct(f.shape, f.dtype),
        in_specs=[pl.BlockSpec(memory_space=pltpu.MemorySpace.VMEM)],
        out_specs=pl.BlockSpec(memory_space=pltpu.MemorySpace.VMEM),
        input_output_aliases={0: 0},  # output aliases the parameter buffer
    )(f)


def init_opt_encoder_params(key, bottleneck_size=1024, dtype=jnp.float32):
    """Matches the PyTorch __init__:
    f ~ Normal(0, sqrt(2 / bottleneck_size)), shape (1, bottleneck_size)."""
    std = math.sqrt(2.0 / float(bottleneck_size))
    f = jax.random.normal(key, (1, bottleneck_size), dtype=dtype) * std
    return f


if __name__ == "__main__":
    key = jax.random.PRNGKey(0)
    k_param, k_x = jax.random.split(key)

    bottleneck_size = 1024
    f = init_opt_encoder_params(k_param, bottleneck_size=bottleneck_size)

    # Small example input (NCHW, as a conv-style caller would provide).
    # It is ignored by the forward pass, matching the PyTorch semantics.
    x = jax.random.normal(k_x, (2, 4, 16, 16), dtype=jnp.float32)

    # Pallas path (grid-less, VMEM whole-array specs, aliased output).
    out = opt_encoder_forward(x, f)
    out = jax.block_until_ready(out)

    # Recommended zero-overhead path.
    out_fast = jax.block_until_ready(opt_encoder_forward_fast(x, f))

    # Correctness checks against the trivially-known reference (out == f).
    assert out.shape == (1, bottleneck_size)
    assert out.dtype == f.dtype
    assert bool(jnp.all(out == f))
    assert bool(jnp.all(out_fast == f))

    print("KERNEL_OK")
</pallas_src>

<mosaic_0001>
module attributes {stable_mosaic.version = 11 : i64} {
  func.func @_opt_encoder_kernel(%arg0: memref<1x1024xf32, #tpu.memory_space<vmem>>, %arg1: memref<1x1024xf32, #tpu.memory_space<vmem>>) attributes {dimension_semantics = [], scalar_prefetch = 0 : i64, scratch_operands = 0 : i64, tpu.core_type = #tpu.core_type<tc>} {
    %c0 = arith.constant 0 : index
    %c0_0 = arith.constant 0 : index
    %0 = vector.load %arg0[%c0, %c0_0] : memref<1x1024xf32, #tpu.memory_space<vmem>>, vector<1x1024xf32>
    %c0_1 = arith.constant 0 : index
    %c0_2 = arith.constant 0 : index
    %1 = vector.load %arg1[%c0_1, %c0_2] : memref<1x1024xf32, #tpu.memory_space<vmem>>, vector<1x1024xf32>
    tpu.vector_store %arg1[%c0_1, %c0_2], %0 {strides = array<i32>} : memref<1x1024xf32, #tpu.memory_space<vmem>>, vector<1x1024xf32>,
    return
  }
}

</mosaic_0001>

<llo_original>
// kernel: tpu_custom_call.1
$region0: #{tpu_custom_call.1}
  #allocation0 [shape = 'u32[]', space=smem, size = 0x4, offset = 0x4, fixed_abs, tag = 'smem constant byte address 0x4 - core index']
  #allocation1 [shape = 'u32[144,128]{1,0:T(1,128)}', space=vmem, size = 0x12000, scoped, tag = 'internal scratch']
  %s0 = inlined_call_operand.hbm [shape: f32[1,1024], index: 0, kind: input, shape index: {}, may-alias: {0,1}]
  %s1 = inlined_call_operand.hbm [shape: f32[1,1024], index: 1, kind: output, shape index: {}, may-alias: {0,1}]
  %s2 = sld [smem:[#allocation0]]
  $region18: #{tpu_custom_call.1} parent=0
    _
  %s4 = ssub.s32 1, %s2
  %s5 = scalar_select 0, %s4, %s2
  $region1: #{tpu_custom_call.1} parent=0
    #allocation2 [shape = 'u8[4096]{0}', space=vmem, size = 0x1000, scoped, tag = 'input window, operand 0, single buffered']
    #allocation3 [shape = 's32[1]{0}', space=sflag, size = 0x4, scoped, tag = 'scoped memory for tpu_custom_call.1']
    #allocation4 [shape = 's32[1]{0}', space=sflag, size = 0x4, scoped, tag = 'scoped memory for tpu_custom_call.1']
    #allocation5 [shape = 'u8[4096]{0}', space=vmem, size = 0x1000, scoped, tag = 'output window, operand 0, single buffered']
    %6 = vsyncpa [#allocation3], 0
    %7 = vsyncpa [#allocation4], 0
    // Predicated region
    $region2: #{tpu_custom_call.1} parent=1 // pred_check
      _
    $region3: #{tpu_custom_call.1} parent=1 // pred_check_branch
      %9 = sbr.rel (0) target = $region5
    $region4: #{tpu_custom_call.1} parent=1 // pred_region
      %s11 = ssub.s32 128, 128
      %12 = vsyncadd [#allocation3], %s11
      %s14 = sshll.u32 [#allocation2], 4
      %s15 = int_to_ptr.vmem [resolvable:$true] %s14
      %17 = dma.hbm_to_vmem [thread:$0]  %s0, 128, %s15, [#allocation3]
    $region5: #{tpu_custom_call.1} parent=1 // pred_fallthru
      _
    // Predicated region
    $region6: #{tpu_custom_call.1} parent=1 // pred_check
      _
    $region7: #{tpu_custom_call.1} parent=1 // pred_check_branch
      %19 = sbr.rel (0) target = $region9
    $region8: #{tpu_custom_call.1} parent=1 // pred_region
      %20 = dma.done [#allocation3], 128
    $region9: #{tpu_custom_call.1} parent=1 // pred_fallthru
      _
    %v21 = vld [vmem:[#allocation2] sm:$0xff]
    %22 = vst [vmem:[#allocation5] sm:$0xff] %v21
    // Predicated region
    $region10: #{tpu_custom_call.1} parent=1 // pred_check
      _
    $region11: #{tpu_custom_call.1} parent=1 // pred_check_branch
      %24 = sbr.rel (0) target = $region13
    $region12: #{tpu_custom_call.1} parent=1 // pred_region
      %s26 = ssub.s32 128, 128
      %27 = vsyncadd [#allocation4], %s26
      %s29 = sshll.u32 [#allocation5], 4
      %s30 = int_to_ptr.vmem [resolvable:$true] %s29
      %32 = dma.vmem_to_hbm [thread:$0]  %s30, 128, %s1, [#allocation4]
    $region13: #{tpu_custom_call.1} parent=1 // pred_fallthru
      _
    // Predicated region
    $region14: #{tpu_custom_call.1} parent=1 // pred_check
      _
    $region15: #{tpu_custom_call.1} parent=1 // pred_check_branch
      %34 = sbr.rel (0) target = $region17
    $region16: #{tpu_custom_call.1} parent=1 // pred_region
      %35 = dma.done [#allocation4], 128
    $region17: #{tpu_custom_call.1} parent=1 // pred_fallthru
      _
    %36 = vsyncpa [#allocation3], 1
    %37 = vsyncpa [#allocation4], 1

</llo_original>
